<compile_context>
chip_gen: v7x
topology: tpu7x:2x2x1
jax: 0.10.0
libtpu: 0.0.40
codegen_flags: <defaults>
</compile_context>

<pallas_src>
import jax
import jax.numpy as jnp
from jax.experimental import pallas as pl
from jax.experimental.pallas import tpu as pltpu


LN_EPS = 1e-5


def _round_up(x, m):
    return ((x + m - 1) // m) * m


def _layer_norm(x, gamma, beta):
    mean = jnp.mean(x, axis=-1, keepdims=True)
    centered = x - mean
    var = jnp.mean(centered * centered, axis=-1, keepdims=True)
    return centered * jax.lax.rsqrt(var + LN_EPS) * gamma + beta


def _make_kernel(instance_norm, transposed_out):
    """Kernel specialization.

    transposed_out=True  : x_ref is (O_pad8, TN)  (row-tile TN on the lane axis)
    transposed_out=False : x_ref is (TN, O_PAD)
    instance_norm=False  : no gamma/beta inputs, no normed output.
    """

    def store_x(normed_f32, w_ref, b_ref, x_ref):
        if transposed_out:
            # (O_pad8, D) x (TN, D) contracting on D -> (O_pad8, TN).
            xt = jax.lax.dot_general(
                w_ref[...], normed_f32,
                dimension_numbers=(((1,), (1,)), ((), ())),
                preferred_element_type=jnp.float32)
            x_ref[...] = (xt + b_ref[...]).astype(x_ref.dtype)
        else:
            x = jnp.dot(normed_f32, w_ref[...],
                        preferred_element_type=jnp.float32)
            x_ref[...] = (x + b_ref[...]).astype(x_ref.dtype)

    if instance_norm:
        def kernel(feats_ref, gamma_ref, beta_ref, w_ref, b_ref,
                   normed_ref, x_ref):
            feats = feats_ref[...].astype(jnp.float32)           # (TN, D)
            normed = _layer_norm(feats, gamma_ref[...], beta_ref[...])
            normed_ref[...] = normed.astype(normed_ref.dtype)
            store_x(normed, w_ref, b_ref, x_ref)
    else:
        def kernel(feats_ref, w_ref, b_ref, x_ref):
            feats = feats_ref[...].astype(jnp.float32)
            store_x(feats, w_ref, b_ref, x_ref)

    return kernel


def fclayer_forward(feats, gamma, beta, weight, bias,
                    instance_norm=True, tn=512):
    """feats: (N, D). weight: (out_size, D) (PyTorch nn.Linear convention).
    Returns (normed_feats, x) matching FCLayer.forward."""
    N, D = feats.shape
    O = weight.shape[0]
    in_dtype = feats.dtype
    in_itemsize = jnp.dtype(in_dtype).itemsize

    transposed_out = O < 128

    # Row-tile granularity: in the transposed-output layout TN sits on the
    # lane axis of the x tile, so it must be a multiple of 128; otherwise a
    # multiple of 8 (sublane) suffices.
    row_mult = 128 if transposed_out else 8

    # Cap TN so large bags give >= 4 grid steps (v7x dual-TC), but never below
    # one row_mult and never above the requested tn.
    quarter = _round_up(-(-N // 4), row_mult)
    TN = max(row_mult, min(_round_up(tn, row_mult), quarter,
                           _round_up(N, row_mult)))
    N_pad = _round_up(N, TN)
    grid = (N_pad // TN,)

    feats_p = feats
    if N_pad != N:
        feats_p = jnp.pad(feats_p, ((0, N_pad - N), (0, 0)))

    # Parameters are tiny: materialize as f32 in their kernel-facing layout.
    gamma2 = gamma.reshape(1, D).astype(jnp.float32)
    beta2 = beta.reshape(1, D).astype(jnp.float32)
    if transposed_out:
        O_pad = _round_up(max(O, 1), 8)
        w_p = jnp.zeros((O_pad, D), jnp.float32).at[:O].set(
            weight.astype(jnp.float32))
        b_p = jnp.zeros((O_pad, 1), jnp.float32).at[:O, 0].set(
            bias.astype(jnp.float32))
        x_shape = (O_pad, N_pad)
        x_block = (O_pad, TN)
        x_index = lambda i: (0, i)
        w_block = (O_pad, D)
        b_block = (O_pad, 1)
    else:
        O_pad = _round_up(max(O, 1), 128)
        w_p = jnp.zeros((D, O_pad), jnp.float32).at[:, :O].set(
            weight.T.astype(jnp.float32))
        b_p = jnp.zeros((1, O_pad), jnp.float32).at[0, :O].set(
            bias.astype(jnp.float32))
        x_shape = (N_pad, O_pad)
        x_block = (TN, O_pad)
        x_index = lambda i: (i, 0)
        w_block = (D, O_pad)
        b_block = (1, O_pad)

    # VMEM budget: double-buffered feats/normed/x tiles + single-buffered
    # params, with 2x headroom.  Floor 4 MiB, cap 64 MiB (v7x physical VMEM).
    feats_tile = TN * D * in_itemsize
    normed_tile = feats_tile if instance_norm else 0
    x_tile = x_block[0] * x_block[1] * in_itemsize
    param_bytes = 4 * (w_p.size + b_p.size + (2 * D if instance_norm else 0))
    working = 2 * (feats_tile + normed_tile + x_tile) + param_bytes
    vmem_limit = int(min(64 << 20, max(4 << 20, 2 * working)))

    cost = pl.CostEstimate(
        flops=2 * N_pad * D * O + (8 * N_pad * D if instance_norm else 0),
        transcendentals=N_pad if instance_norm else 0,
        bytes_accessed=(N_pad * D * in_itemsize                      # feats read
                        + (N_pad * D * in_itemsize if instance_norm else 0)
                        + N_pad * O * in_itemsize                    # x (real O)
                        + 4 * (D * O + 2 * D + O)),                  # params
    )

    kernel = _make_kernel(instance_norm, transposed_out)

    def run(single_buffer_params):
        res_kw = {}
        if single_buffer_params and hasattr(pl, "Buffered"):
            res_kw = {"pipeline_mode": pl.Buffered(1)}

        def resident(block):
            return pl.BlockSpec(block, lambda i: (0, 0), **res_kw)

        feats_spec = pl.BlockSpec((TN, D), lambda i: (i, 0))
        w_spec = resident(w_block)
        b_spec = resident(b_block)

        if instance_norm:
            in_specs = [feats_spec, resident((1, D)), resident((1, D)),
                        w_spec, b_spec]
            out_shape = (jax.ShapeDtypeStruct((N_pad, D), in_dtype),
                         jax.ShapeDtypeStruct(x_shape, in_dtype))
            out_specs = [pl.BlockSpec((TN, D), lambda i: (i, 0)),
                         pl.BlockSpec(x_block, x_index)]
            args = (feats_p, gamma2, beta2, w_p, b_p)
        else:
            in_specs = [feats_spec, w_spec, b_spec]
            out_shape = jax.ShapeDtypeStruct(x_shape, in_dtype)
            out_specs = pl.BlockSpec(x_block, x_index)
            args = (feats_p, w_p, b_p)

        return pl.pallas_call(
            kernel,
            out_shape=out_shape,
            grid_spec=pltpu.PrefetchScalarGridSpec(
                num_scalar_prefetch=0,
                grid=grid,
                in_specs=in_specs,
                out_specs=out_specs,
            ),
            compiler_params=pltpu.CompilerParams(
                dimension_semantics=("parallel",),
                vmem_limit_bytes=vmem_limit),
            cost_estimate=cost,
        )(*args)

    try:
        outs = run(single_buffer_params=True)
    except Exception:
        # Fallback if single-buffered (Buffered(1)) params are unsupported.
        outs = run(single_buffer_params=False)

    if instance_norm:
        normed_p, x_p = outs
        normed = normed_p[:N]
    else:
        x_p = outs
        normed = feats                     # untouched input, no HBM round-trip

    if transposed_out:
        x = x_p[:O, :N].T                  # free-ish for (1, N)
    else:
        x = x_p[:N, :O]
    return normed, x


def _reference(feats, gamma, beta, weight, bias, instance_norm=True):
    f = feats.astype(jnp.float32)
    if instance_norm:
        mean = jnp.mean(f, axis=-1, keepdims=True)
        var = jnp.mean((f - mean) ** 2, axis=-1, keepdims=True)
        normed = (f - mean) * jax.lax.rsqrt(var + LN_EPS) * gamma + beta
    else:
        normed = f
    x = normed @ weight.T.astype(jnp.float32) + bias.astype(jnp.float32)
    return normed, x


if __name__ == "__main__":
    key = jax.random.PRNGKey(0)
    in_size, out_size = 32, 1
    k1, k2, k3, k4 = jax.random.split(key, 4)

    # nn.Linear(in_size, out_size) params (deterministic synthetic init)
    bound = 1.0 / (in_size ** 0.5)
    weight = jax.random.uniform(k2, (out_size, in_size), jnp.float32,
                                -bound, bound)
    bias = jax.random.uniform(k3, (out_size,), jnp.float32, -bound, bound)

    # nn.LayerNorm(in_size, elementwise_affine=True) default init
    gamma = jnp.ones((in_size,), jnp.float32)
    beta = jnp.zeros((in_size,), jnp.float32)

    # --- 1. module-default case: instance_norm=True, out_size=1 ------------
    N = 8
    feats = jax.random.normal(k1, (N, in_size), dtype=jnp.float32)
    normed, x = fclayer_forward(feats, gamma, beta, weight, bias)
    jax.block_until_ready((normed, x))
    ref_n, ref_x = _reference(feats, gamma, beta, weight, bias)
    assert normed.shape == (N, in_size) and x.shape == (N, out_size)
    assert jnp.allclose(normed, ref_n, atol=1e-5, rtol=1e-5)
    assert jnp.allclose(x, ref_x, atol=1e-5, rtol=1e-5)

    # --- 2. multi-tile grid + bf16 feats (native-dtype input path) ---------
    N2 = 200
    feats2 = jax.random.normal(jax.random.PRNGKey(1), (N2, in_size),
                               dtype=jnp.float32).astype(jnp.bfloat16)
    normed2, x2 = fclayer_forward(feats2, gamma, beta, weight, bias)
    jax.block_until_ready((normed2, x2))
    ref_n2, ref_x2 = _reference(feats2, gamma, beta, weight, bias)
    assert normed2.shape == (N2, in_size) and x2.shape == (N2, out_size)
    assert normed2.dtype == jnp.bfloat16 and x2.dtype == jnp.bfloat16
    assert jnp.allclose(normed2.astype(jnp.float32), ref_n2,
                        atol=5e-2, rtol=5e-2)
    assert jnp.allclose(x2.astype(jnp.float32), ref_x2, atol=5e-2, rtol=5e-2)

    # --- 3. instance_norm=False: feats returned untouched, x only ----------
    normed3, x3 = fclayer_forward(feats, gamma, beta, weight, bias,
                                  instance_norm=False)
    jax.block_until_ready(x3)
    _, ref_x3 = _reference(feats, gamma, beta, weight, bias,
                           instance_norm=False)
    assert normed3 is feats
    assert jnp.allclose(x3, ref_x3, atol=1e-5, rtol=1e-5)

    # --- 4. wide-output path (O >= 128 keeps the (TN, O_PAD) layout) -------
    out_wide = 128
    weight_w = jax.random.uniform(k4, (out_wide, in_size), jnp.float32,
                                  -bound, bound)
    bias_w = jnp.zeros((out_wide,), jnp.float32)
    feats4 = jax.random.normal(jax.random.PRNGKey(2), (16, in_size),
                               dtype=jnp.float32)
    normed4, x4 = fclayer_forward(feats4, gamma, beta, weight_w, bias_w)
    jax.block_until_ready((normed4, x4))
    ref_n4, ref_x4 = _reference(feats4, gamma, beta, weight_w, bias_w)
    assert x4.shape == (16, out_wide)
    assert jnp.allclose(normed4, ref_n4, atol=1e-5, rtol=1e-5)
    assert jnp.allclose(x4, ref_x4, atol=1e-4, rtol=1e-4)

    print("KERNEL_OK")
</pallas_src>

<mosaic_0001>
module attributes {stable_mosaic.version = 11 : i64} {
  func.func @kernel(%arg0: i32, %arg1: memref<128x32xf32, #tpu.memory_space<vmem>>, %arg2: memref<1x32xf32, #tpu.memory_space<vmem>>, %arg3: memref<1x32xf32, #tpu.memory_space<vmem>>, %arg4: memref<8x32xf32, #tpu.memory_space<vmem>>, %arg5: memref<8x1xf32, #tpu.memory_space<vmem>>, %arg6: memref<128x32xf32, #tpu.memory_space<vmem>>, %arg7: memref<8x128xf32, #tpu.memory_space<vmem>>) attributes {dimension_semantics = [#tpu.dimension_semantics<parallel>], iteration_bounds = array<i64: 1>, scalar_prefetch = 0 : i64, scratch_operands = 0 : i64, tpu.core_type = #tpu.core_type<tc>, window_params = [{transform_indices = @transform_0, window_bounds = array<i64: 128, 32>}, {pipeline_mode = #tpu.pipeline_mode<synchronous>, transform_indices = @transform_1, window_bounds = array<i64: 1, 32>}, {pipeline_mode = #tpu.pipeline_mode<synchronous>, transform_indices = @transform_2, window_bounds = array<i64: 1, 32>}, {pipeline_mode = #tpu.pipeline_mode<synchronous>, transform_indices = @transform_3, window_bounds = array<i64: 8, 32>}, {pipeline_mode = #tpu.pipeline_mode<synchronous>, transform_indices = @transform_4, window_bounds = array<i64: 8, 1>}, {transform_indices = @transform_5, window_bounds = array<i64: 128, 32>}, {transform_indices = @transform_6, window_bounds = array<i64: 8, 128>}]} {
    %c0 = arith.constant 0 : index
    %c0_0 = arith.constant 0 : index
    %0 = vector.load %arg1[%c0, %c0_0] : memref<128x32xf32, #tpu.memory_space<vmem>>, vector<128x32xf32>
    %c0_1 = arith.constant 0 : index
    %c0_2 = arith.constant 0 : index
    %1 = vector.load %arg2[%c0_1, %c0_2] : memref<1x32xf32, #tpu.memory_space<vmem>>, vector<1x32xf32>
    %c0_3 = arith.constant 0 : index
    %c0_4 = arith.constant 0 : index
    %2 = vector.load %arg3[%c0_3, %c0_4] : memref<1x32xf32, #tpu.memory_space<vmem>>, vector<1x32xf32>
    %cst = arith.constant dense<0.000000e+00> : vector<128xf32>
    %3 = vector.multi_reduction <add>, %0, %cst [1] : vector<128x32xf32> to vector<128xf32>
    %4 = vector.shape_cast %3 : vector<128xf32> to vector<128x1xf32>
    %cst_5 = arith.constant 3.200000e+01 : f32
    %5 = vector.broadcast %cst_5 : f32 to vector<128x1xf32>
    %6 = arith.divf %4, %5 : vector<128x1xf32>
    %7 = vector.broadcast %6 : vector<128x1xf32> to vector<128x32xf32>
    %8 = arith.subf %0, %7 : vector<128x32xf32>
    %9 = arith.mulf %8, %8 : vector<128x32xf32>
    %cst_6 = arith.constant dense<0.000000e+00> : vector<128xf32>
    %10 = vector.multi_reduction <add>, %9, %cst_6 [1] : vector<128x32xf32> to vector<128xf32>
    %11 = vector.shape_cast %10 : vector<128xf32> to vector<128x1xf32>
    %cst_7 = arith.constant 3.200000e+01 : f32
    %12 = vector.broadcast %cst_7 : f32 to vector<128x1xf32>
    %13 = arith.divf %11, %12 : vector<128x1xf32>
    %cst_8 = arith.constant 9.99999974E-6 : f32
    %14 = vector.broadcast %cst_8 : f32 to vector<128x1xf32>
    %15 = arith.addf %13, %14 : vector<128x1xf32>
    %16 = math.rsqrt %15 : vector<128x1xf32>
    %17 = vector.broadcast %16 : vector<128x1xf32> to vector<128x32xf32>
    %18 = arith.mulf %8, %17 : vector<128x32xf32>
    %19 = vector.broadcast %1 : vector<1x32xf32> to vector<128x32xf32>
    %20 = arith.mulf %18, %19 : vector<128x32xf32>
    %21 = vector.broadcast %2 : vector<1x32xf32> to vector<128x32xf32>
    %22 = arith.addf %20, %21 : vector<128x32xf32>
    %c0_9 = arith.constant 0 : index
    %c0_10 = arith.constant 0 : index
    %23 = vector.load %arg6[%c0_9, %c0_10] : memref<128x32xf32, #tpu.memory_space<vmem>>, vector<128x32xf32>
    tpu.vector_store %arg6[%c0_9, %c0_10], %22 {strides = array<i32>} : memref<128x32xf32, #tpu.memory_space<vmem>>, vector<128x32xf32>,
    %c0_11 = arith.constant 0 : index
    %c0_12 = arith.constant 0 : index
    %24 = vector.load %arg4[%c0_11, %c0_12] : memref<8x32xf32, #tpu.memory_space<vmem>>, vector<8x32xf32>
    %cst_13 = arith.constant dense<0.000000e+00> : vector<8x128xf32>
    %25 = tpu.matmul %24, %22, %cst_13 {dimension_numbers = #tpu.dot_dimension_numbers<[1], [1], [0], [0], [0, 0, 1, 0], [], []>} : vector<8x32xf32>, vector<128x32xf32>, vector<8x128xf32> -> vector<8x128xf32>
    %c0_14 = arith.constant 0 : index
    %c0_15 = arith.constant 0 : index
    %26 = vector.load %arg5[%c0_14, %c0_15] : memref<8x1xf32, #tpu.memory_space<vmem>>, vector<8x1xf32>
    %27 = vector.broadcast %26 : vector<8x1xf32> to vector<8x128xf32>
    %28 = arith.addf %25, %27 : vector<8x128xf32>
    %c0_16 = arith.constant 0 : index
    %c0_17 = arith.constant 0 : index
    %29 = vector.load %arg7[%c0_16, %c0_17] : memref<8x128xf32, #tpu.memory_space<vmem>>, vector<8x128xf32>
    tpu.vector_store %arg7[%c0_16, %c0_17], %28 {strides = array<i32>} : memref<8x128xf32, #tpu.memory_space<vmem>>, vector<8x128xf32>,
    return
  }
  func.func @transform_0(%arg0: i32) -> (i32, i32) {
    %c0_i32 = arith.constant 0 : i32
    %c0_i32_0 = arith.constant 0 : i32
    return %arg0, %c0_i32 : i32, i32
  }
  func.func @transform_1(%arg0: i32) -> (i32, i32) {
    %c0_i32 = arith.constant 0 : i32
    %c0_i32_0 = arith.constant 0 : i32
    %c0_i32_1 = arith.constant 0 : i32
    return %c0_i32, %c0_i32_0 : i32, i32
  }
  func.func @transform_2(%arg0: i32) -> (i32, i32) {
    %c0_i32 = arith.constant 0 : i32
    %c0_i32_0 = arith.constant 0 : i32
    %c0_i32_1 = arith.constant 0 : i32
    return %c0_i32, %c0_i32_0 : i32, i32
  }
  func.func @transform_3(%arg0: i32) -> (i32, i32) {
    %c0_i32 = arith.constant 0 : i32
    %c0_i32_0 = arith.constant 0 : i32
    %c0_i32_1 = arith.constant 0 : i32
    return %c0_i32, %c0_i32_0 : i32, i32
  }
  func.func @transform_4(%arg0: i32) -> (i32, i32) {
    %c0_i32 = arith.constant 0 : i32
    %c0_i32_0 = arith.constant 0 : i32
    %c0_i32_1 = arith.constant 0 : i32
    return %c0_i32, %c0_i32_0 : i32, i32
  }
  func.func @transform_5(%arg0: i32) -> (i32, i32) {
    %c0_i32 = arith.constant 0 : i32
    %c0_i32_0 = arith.constant 0 : i32
    return %arg0, %c0_i32 : i32, i32
  }
  func.func @transform_6(%arg0: i32) -> (i32, i32) {
    %c0_i32 = arith.constant 0 : i32
    %c0_i32_0 = arith.constant 0 : i32
    return %c0_i32, %arg0 : i32, i32
  }
}

module attributes {stable_mosaic.version = 11 : i64} {
  func.func @kernel(%arg0: i32, %arg1: memref<128x32xf32, #tpu.memory_space<vmem>>, %arg2: memref<1x32xf32, #tpu.memory_space<vmem>>, %arg3: memref<1x32xf32, #tpu.memory_space<vmem>>, %arg4: memref<8x32xf32, #tpu.memory_space<vmem>>, %arg5: memref<8x1xf32, #tpu.memory_space<vmem>>, %arg6: memref<128x32xf32, #tpu.memory_space<vmem>>, %arg7: memref<8x128xf32, #tpu.memory_space<vmem>>) attributes {dimension_semantics = [#tpu.dimension_semantics<parallel>], iteration_bounds = array<i64: 1>, scalar_prefetch = 0 : i64, scratch_operands = 0 : i64, tpu.core_type = #tpu.core_type<tc>, window_params = [{transform_indices = @transform_0, window_bounds = array<i64: 128, 32>}, {pipeline_mode = #tpu.pipeline_mode<synchronous>, transform_indices = @transform_1, window_bounds = array<i64: 1, 32>}, {pipeline_mode = #tpu.pipeline_mode<synchronous>, transform_indices = @transform_2, window_bounds = array<i64: 1, 32>}, {pipeline_mode = #tpu.pipeline_mode<synchronous>, transform_indices = @transform_3, window_bounds = array<i64: 8, 32>}, {pipeline_mode = #tpu.pipeline_mode<synchronous>, transform_indices = @transform_4, window_bounds = array<i64: 8, 1>}, {transform_indices = @transform_5, window_bounds = array<i64: 128, 32>}, {transform_indices = @transform_6, window_bounds = array<i64: 8, 128>}]} {
    %c0 = arith.constant 0 : index
    %c0_0 = arith.constant 0 : index
    %0 = vector.load %arg1[%c0, %c0_0] : memref<128x32xf32, #tpu.memory_space<vmem>>, vector<128x32xf32>
    %c0_1 = arith.constant 0 : index
    %c0_2 = arith.constant 0 : index
    %1 = vector.load %arg2[%c0_1, %c0_2] : memref<1x32xf32, #tpu.memory_space<vmem>>, vector<1x32xf32>
    %c0_3 = arith.constant 0 : index
    %c0_4 = arith.constant 0 : index
    %2 = vector.load %arg3[%c0_3, %c0_4] : memref<1x32xf32, #tpu.memory_space<vmem>>, vector<1x32xf32>
    %cst = arith.constant dense<0.000000e+00> : vector<128xf32>
    %3 = vector.multi_reduction <add>, %0, %cst [1] : vector<128x32xf32> to vector<128xf32>
    %4 = vector.shape_cast %3 : vector<128xf32> to vector<128x1xf32>
    %cst_5 = arith.constant 3.200000e+01 : f32
    %5 = vector.broadcast %cst_5 : f32 to vector<128x1xf32>
    %6 = arith.divf %4, %5 : vector<128x1xf32>
    %7 = vector.broadcast %6 : vector<128x1xf32> to vector<128x32xf32>
    %8 = arith.subf %0, %7 : vector<128x32xf32>
    %9 = arith.mulf %8, %8 : vector<128x32xf32>
    %cst_6 = arith.constant dense<0.000000e+00> : vector<128xf32>
    %10 = vector.multi_reduction <add>, %9, %cst_6 [1] : vector<128x32xf32> to vector<128xf32>
    %11 = vector.shape_cast %10 : vector<128xf32> to vector<128x1xf32>
    %cst_7 = arith.constant 3.200000e+01 : f32
    %12 = vector.broadcast %cst_7 : f32 to vector<128x1xf32>
    %13 = arith.divf %11, %12 : vector<128x1xf32>
    %cst_8 = arith.constant 9.99999974E-6 : f32
    %14 = vector.broadcast %cst_8 : f32 to vector<128x1xf32>
    %15 = arith.addf %13, %14 : vector<128x1xf32>
    %16 = math.rsqrt %15 : vector<128x1xf32>
    %17 = vector.broadcast %16 : vector<128x1xf32> to vector<128x32xf32>
    %18 = arith.mulf %8, %17 : vector<128x32xf32>
    %19 = vector.broadcast %1 : vector<1x32xf32> to vector<128x32xf32>
    %20 = arith.mulf %18, %19 : vector<128x32xf32>
    %21 = vector.broadcast %2 : vector<1x32xf32> to vector<128x32xf32>
    %22 = arith.addf %20, %21 : vector<128x32xf32>
    %c0_9 = arith.constant 0 : index
    %c0_10 = arith.constant 0 : index
    %23 = vector.load %arg6[%c0_9, %c0_10] : memref<128x32xf32, #tpu.memory_space<vmem>>, vector<128x32xf32>
    tpu.vector_store %arg6[%c0_9, %c0_10], %22 {strides = array<i32>} : memref<128x32xf32, #tpu.memory_space<vmem>>, vector<128x32xf32>,
    %c0_11 = arith.constant 0 : index
    %c0_12 = arith.constant 0 : index
    %24 = vector.load %arg4[%c0_11, %c0_12] : memref<8x32xf32, #tpu.memory_space<vmem>>, vector<8x32xf32>
    %cst_13 = arith.constant dense<0.000000e+00> : vector<8x128xf32>
    %25 = tpu.matmul %24, %22, %cst_13 {dimension_numbers = #tpu.dot_dimension_numbers<[1], [1], [0], [0], [0, 0, 1, 0], [], []>} : vector<8x32xf32>, vector<128x32xf32>, vector<8x128xf32> -> vector<8x128xf32>
    %c0_14 = arith.constant 0 : index
    %c0_15 = arith.constant 0 : index
    %26 = vector.load %arg5[%c0_14, %c0_15] : memref<8x1xf32, #tpu.memory_space<vmem>>, vector<8x1xf32>
    %27 = vector.broadcast %26 : vector<8x1xf32> to vector<8x128xf32>
    %28 = arith.addf %25, %27 : vector<8x128xf32>
    %c0_16 = arith.constant 0 : index
    %c0_17 = arith.constant 0 : index
    %29 = vector.load %arg7[%c0_16, %c0_17] : memref<8x128xf32, #tpu.memory_space<vmem>>, vector<8x128xf32>
    tpu.vector_store %arg7[%c0_16, %c0_17], %28 {strides = array<i32>} : memref<8x128xf32, #tpu.memory_space<vmem>>, vector<8x128xf32>,
    return
  }
  func.func @transform_0(%arg0: i32) -> (i32, i32) {
    %c0_i32 = arith.constant 0 : i32
    %c0_i32_0 = arith.constant 0 : i32
    return %arg0, %c0_i32 : i32, i32
  }
  func.func @transform_1(%arg0: i32) -> (i32, i32) {
    %c0_i32 = arith.constant 0 : i32
    %c0_i32_0 = arith.constant 0 : i32
    %c0_i32_1 = arith.constant 0 : i32
    return %c0_i32, %c0_i32_0 : i32, i32
  }
  func.func @transform_2(%arg0: i32) -> (i32, i32) {
    %c0_i32 = arith.constant 0 : i32
    %c0_i32_0 = arith.constant 0 : i32
    %c0_i32_1 = arith.constant 0 : i32
    return %c0_i32, %c0_i32_0 : i32, i32
  }
  func.func @transform_3(%arg0: i32) -> (i32, i32) {
    %c0_i32 = arith.constant 0 : i32
    %c0_i32_0 = arith.constant 0 : i32
    %c0_i32_1 = arith.constant 0 : i32
    return %c0_i32, %c0_i32_0 : i32, i32
  }
  func.func @transform_4(%arg0: i32) -> (i32, i32) {
    %c0_i32 = arith.constant 0 : i32
    %c0_i32_0 = arith.constant 0 : i32
    %c0_i32_1 = arith.constant 0 : i32
    return %c0_i32, %c0_i32_0 : i32, i32
  }
  func.func @transform_5(%arg0: i32) -> (i32, i32) {
    %c0_i32 = arith.constant 0 : i32
    %c0_i32_0 = arith.constant 0 : i32
    return %arg0, %c0_i32 : i32, i32
  }
  func.func @transform_6(%arg0: i32) -> (i32, i32) {
    %c0_i32 = arith.constant 0 : i32
    %c0_i32_0 = arith.constant 0 : i32
    return %c0_i32, %arg0 : i32, i32
  }
}

</mosaic_0001>

<llo_original>
// kernel: tpu_custom_call.1
$region0: #{tpu_custom_call.1}
  #allocation0 [shape = 'u32[]', space=smem, size = 0x4, offset = 0x4, fixed_abs, tag = 'smem constant byte address 0x4 - core index']
  #allocation1 [shape = 'u32[144,128]{1,0:T(1,128)}', space=vmem, size = 0x12000, scoped, tag = 'internal scratch']
  %s0 = inlined_call_operand.vmem [shape: f32[128,32], index: 0, kind: input, shape index: {}]
  %s1 = inlined_call_operand.vmem [shape: f32[1,32], index: 1, kind: input, shape index: {}]
  %s2 = inlined_call_operand.vmem [shape: f32[1,32], index: 2, kind: input, shape index: {}]
  %s3 = inlined_call_operand.vmem [shape: f32[8,32], index: 3, kind: input, shape index: {}]
  %s4 = inlined_call_operand.vmem [shape: f32[8,1], index: 4, kind: input, shape index: {}]
  %s5 = inlined_call_operand.vmem [shape: f32[128,32], index: 5, kind: output, shape index: {0}]
  %s6 = inlined_call_operand.hbm [shape: f32[8,128], index: 6, kind: output, shape index: {1}]
  %7 = xla_tuple %s5, %s6
  %s8 = sld [smem:[#allocation0]]
  $region38: #{tpu_custom_call.1} parent=0
    _
  %s10 = ssub.s32 1, %s8
  %s11 = scalar_select 0, %s10, %s8
  $region1: #{tpu_custom_call.1} parent=0
    #allocation2 [shape = 'u8[4096]{0}', space=vmem, size = 0x1000, scoped, tag = 'output window, operand 1, single buffered']
    #allocation3 [shape = 's32[1]{0}', space=sflag, size = 0x4, scoped, tag = 'scoped memory for tpu_custom_call.1']
    %12 = vsyncpa [#allocation3], 0
    // Predicated region
    $region2: #{tpu_custom_call.1} parent=1 // pred_check
      _
    $region3: #{tpu_custom_call.1} parent=1 // pred_check_branch
      %14 = sbr.rel (0) target = $region5
    $region4: #{tpu_custom_call.1} parent=1 // pred_region
      _
    $region5: #{tpu_custom_call.1} parent=1 // pred_fallthru
      _
    // Predicated region
    $region6: #{tpu_custom_call.1} parent=1 // pred_check
      _
    $region7: #{tpu_custom_call.1} parent=1 // pred_check_branch
      %16 = sbr.rel (0) target = $region9
    $region8: #{tpu_custom_call.1} parent=1 // pred_region
      _
    $region9: #{tpu_custom_call.1} parent=1 // pred_fallthru
      _
    // Predicated region
    $region10: #{tpu_custom_call.1} parent=1 // pred_check
      _
    $region11: #{tpu_custom_call.1} parent=1 // pred_check_branch
      %18 = sbr.rel (0) target = $region13
    $region12: #{tpu_custom_call.1} parent=1 // pred_region
      _
    $region13: #{tpu_custom_call.1} parent=1 // pred_fallthru
      _
    // Predicated region
    $region14: #{tpu_custom_call.1} parent=1 // pred_check
      _
    $region15: #{tpu_custom_call.1} parent=1 // pred_check_branch
      %20 = sbr.rel (0) target = $region17
    $region16: #{tpu_custom_call.1} parent=1 // pred_region
      _
    $region17: #{tpu_custom_call.1} parent=1 // pred_fallthru
      _
    // Predicated region
    $region18: #{tpu_custom_call.1} parent=1 // pred_check
      _
    $region19: #{tpu_custom_call.1} parent=1 // pred_check_branch
      %22 = sbr.rel (0) target = $region21
    $region20: #{tpu_custom_call.1} parent=1 // pred_region
      _
    $region21: #{tpu_custom_call.1} parent=1 // pred_fallthru
      _
    %v23 = vld [vmem:[%s0] sm:$0xff]
    %v24 = vld [vmem:[%s0 + $0x8] sm:$0xff]
    %v25 = vld [vmem:[%s0 + $0x10] sm:$0xff]
    %v26 = vld [vmem:[%s0 + $0x18] sm:$0xff]
    %v27 = vld [vmem:[%s0 + $0x20] sm:$0xff]
    %v28 = vld [vmem:[%s0 + $0x28] sm:$0xff]
    %v29 = vld [vmem:[%s0 + $0x30] sm:$0xff]
    %v30 = vld [vmem:[%s0 + $0x38] sm:$0xff]
    %v31 = vld [vmem:[%s0 + $0x40] sm:$0xff]
    %v32 = vld [vmem:[%s0 + $0x48] sm:$0xff]
    %v33 = vld [vmem:[%s0 + $0x50] sm:$0xff]
    %v34 = vld [vmem:[%s0 + $0x58] sm:$0xff]
    %v35 = vld [vmem:[%s0 + $0x60] sm:$0xff]
    %v36 = vld [vmem:[%s0 + $0x68] sm:$0xff]
    %v37 = vld [vmem:[%s0 + $0x70] sm:$0xff]
    %v38 = vld [vmem:[%s0 + $0x78] sm:$0xff]
    %v39 = vld [vmem:[%s1] sm:$0x1]
    %v40 = vld [vmem:[%s2] sm:$0x1]
    %vm41 = vcmask 261120
    %v42 = vsel %vm41, %v23, 0.0
    %43 = vadd.xlane.f32.xlu0 %v42
    %v44 = vpop.xlane.xlu0 %43
    %v45 = vsel %vm41, %v24, 0.0
    %46 = vadd.xlane.f32.xlu0 %v45
    %v47 = vpop.xlane.xlu0 %46
    %v48 = vsel %vm41, %v25, 0.0
    %49 = vadd.xlane.f32.xlu0 %v48
    %v50 = vpop.xlane.xlu0 %49
    %v51 = vsel %vm41, %v26, 0.0
    %52 = vadd.xlane.f32.xlu0 %v51
    %v53 = vpop.xlane.xlu0 %52
    %v54 = vsel %vm41, %v27, 0.0
    %55 = vadd.xlane.f32.xlu0 %v54
    %v56 = vpop.xlane.xlu0 %55
    %v57 = vsel %vm41, %v28, 0.0
    %58 = vadd.xlane.f32.xlu0 %v57
    %v59 = vpop.xlane.xlu0 %58
    %v60 = vsel %vm41, %v29, 0.0
    %61 = vadd.xlane.f32.xlu0 %v60
    %v62 = vpop.xlane.xlu0 %61
    %v63 = vsel %vm41, %v30, 0.0
    %64 = vadd.xlane.f32.xlu0 %v63
    %v65 = vpop.xlane.xlu0 %64
    %v66 = vsel %vm41, %v31, 0.0
    %67 = vadd.xlane.f32.xlu0 %v66
    %v68 = vpop.xlane.xlu0 %67
    %v69 = vsel %vm41, %v32, 0.0
    %70 = vadd.xlane.f32.xlu0 %v69
    %v71 = vpop.xlane.xlu0 %70
    %v72 = vsel %vm41, %v33, 0.0
    %73 = vadd.xlane.f32.xlu0 %v72
    %v74 = vpop.xlane.xlu0 %73
    %v75 = vsel %vm41, %v34, 0.0
    %76 = vadd.xlane.f32.xlu0 %v75
    %v77 = vpop.xlane.xlu0 %76
    %v78 = vsel %vm41, %v35, 0.0
    %79 = vadd.xlane.f32.xlu0 %v78
    %v80 = vpop.xlane.xlu0 %79
    %v81 = vsel %vm41, %v36, 0.0
    %82 = vadd.xlane.f32.xlu0 %v81
    %v83 = vpop.xlane.xlu0 %82
    %v84 = vsel %vm41, %v37, 0.0
    %85 = vadd.xlane.f32.xlu0 %v84
    %v86 = vpop.xlane.xlu0 %85
    %v87 = vsel %vm41, %v38, 0.0
    %88 = vadd.xlane.f32.xlu0 %v87
    %v89 = vpop.xlane.xlu0 %88
    %v90 = vrcp.pop 32.0
    %v91 = vmul.f32 %v44, %v90
    %v92 = vmul.f32 %v47, %v90
    %v93 = vmul.f32 %v50, %v90
    %v94 = vmul.f32 %v53, %v90
    %v95 = vmul.f32 %v56, %v90
    %v96 = vmul.f32 %v59, %v90
    %v97 = vmul.f32 %v62, %v90
    %v98 = vmul.f32 %v65, %v90
    %v99 = vmul.f32 %v68, %v90
    %v100 = vmul.f32 %v71, %v90
    %v101 = vmul.f32 %v74, %v90
    %v102 = vmul.f32 %v77, %v90
    %v103 = vmul.f32 %v80, %v90
    %v104 = vmul.f32 %v83, %v90
    %v105 = vmul.f32 %v86, %v90
    %v106 = vmul.f32 %v89, %v90
    %v107 = vsub.f32 %v23, %v91
    %v108 = vsub.f32 %v24, %v92
    %v109 = vsub.f32 %v25, %v93
    %v110 = vsub.f32 %v26, %v94
    %v111 = vsub.f32 %v27, %v95
    %v112 = vsub.f32 %v28, %v96
    %v113 = vsub.f32 %v29, %v97
    %v114 = vsub.f32 %v30, %v98
    %v115 = vsub.f32 %v31, %v99
    %v116 = vsub.f32 %v32, %v100
    %v117 = vsub.f32 %v33, %v101
    %v118 = vsub.f32 %v34, %v102
    %v119 = vsub.f32 %v35, %v103
    %v120 = vsub.f32 %v36, %v104
    %v121 = vsub.f32 %v37, %v105
    %v122 = vsub.f32 %v38, %v106
    %v123 = vmul.f32 %v107, %v107
    %v124 = vmul.f32 %v108, %v108
    %v125 = vmul.f32 %v109, %v109
    %v126 = vmul.f32 %v110, %v110
    %v127 = vmul.f32 %v111, %v111
    %v128 = vmul.f32 %v112, %v112
    %v129 = vmul.f32 %v113, %v113
    %v130 = vmul.f32 %v114, %v114
    %v131 = vmul.f32 %v115, %v115
    %v132 = vmul.f32 %v116, %v116
    %v133 = vmul.f32 %v117, %v117
    %v134 = vmul.f32 %v118, %v118
    %v135 = vmul.f32 %v119, %v119
    %v136 = vmul.f32 %v120, %v120
    %v137 = vmul.f32 %v121, %v121
    %v138 = vmul.f32 %v122, %v122
    %v139 = vsel %vm41, %v123, 0.0
    %140 = vadd.xlane.f32.xlu0 %v139
    %v141 = vpop.xlane.xlu0 %140
    %v142 = vsel %vm41, %v124, 0.0
    %143 = vadd.xlane.f32.xlu0 %v142
    %v144 = vpop.xlane.xlu0 %143
    %v145 = vsel %vm41, %v125, 0.0
    %146 = vadd.xlane.f32.xlu0 %v145
    %v147 = vpop.xlane.xlu0 %146
    %v148 = vsel %vm41, %v126, 0.0
    %149 = vadd.xlane.f32.xlu0 %v148
    %v150 = vpop.xlane.xlu0 %149
    %v151 = vsel %vm41, %v127, 0.0
    %152 = vadd.xlane.f32.xlu0 %v151
    %v153 = vpop.xlane.xlu0 %152
    %v154 = vsel %vm41, %v128, 0.0
    %155 = vadd.xlane.f32.xlu0 %v154
    %v156 = vpop.xlane.xlu0 %155
    %v157 = vsel %vm41, %v129, 0.0
    %158 = vadd.xlane.f32.xlu0 %v157
    %v159 = vpop.xlane.xlu0 %158
    %v160 = vsel %vm41, %v130, 0.0
    %161 = vadd.xlane.f32.xlu0 %v160
    %v162 = vpop.xlane.xlu0 %161
    %v163 = vsel %vm41, %v131, 0.0
    %164 = vadd.xlane.f32.xlu0 %v163
    %v165 = vpop.xlane.xlu0 %164
    %v166 = vsel %vm41, %v132, 0.0
    %167 = vadd.xlane.f32.xlu0 %v166
    %v168 = vpop.xlane.xlu0 %167
    %v169 = vsel %vm41, %v133, 0.0
    %170 = vadd.xlane.f32.xlu0 %v169
    %v171 = vpop.xlane.xlu0 %170
    %v172 = vsel %vm41, %v134, 0.0
    %173 = vadd.xlane.f32.xlu0 %v172
    %v174 = vpop.xlane.xlu0 %173
    %v175 = vsel %vm41, %v135, 0.0
    %176 = vadd.xlane.f32.xlu0 %v175
    %v177 = vpop.xlane.xlu0 %176
    %v178 = vsel %vm41, %v136, 0.0
    %179 = vadd.xlane.f32.xlu0 %v178
    %v180 = vpop.xlane.xlu0 %179
    %v181 = vsel %vm41, %v137, 0.0
    %182 = vadd.xlane.f32.xlu0 %v181
    %v183 = vpop.xlane.xlu0 %182
    %v184 = vsel %vm41, %v138, 0.0
    %185 = vadd.xlane.f32.xlu0 %v184
    %v186 = vpop.xlane.xlu0 %185
    %v187 = vmul.f32 %v141, %v90
    %v188 = vmul.f32 %v144, %v90
    %v189 = vmul.f32 %v147, %v90
    %v190 = vmul.f32 %v150, %v90
    %v191 = vmul.f32 %v153, %v90
    %v192 = vmul.f32 %v156, %v90
    %v193 = vmul.f32 %v159, %v90
    %v194 = vmul.f32 %v162, %v90
    %v195 = vmul.f32 %v165, %v90
    %v196 = vmul.f32 %v168, %v90
    %v197 = vmul.f32 %v171, %v90
    %v198 = vmul.f32 %v174, %v90
    %v199 = vmul.f32 %v177, %v90
    %v200 = vmul.f32 %v180, %v90
    %v201 = vmul.f32 %v183, %v90
    %v202 = vmul.f32 %v186, %v90
    %v203 = vadd.f32 %v187, 1e-05
    %v204 = vadd.f32 %v188, 1e-05
    %v205 = vadd.f32 %v189, 1e-05
    %v206 = vadd.f32 %v190, 1e-05
    %v207 = vadd.f32 %v191, 1e-05
    %v208 = vadd.f32 %v192, 1e-05
    %v209 = vadd.f32 %v193, 1e-05
    %v210 = vadd.f32 %v194, 1e-05
    %v211 = vadd.f32 %v195, 1e-05
    %v212 = vadd.f32 %v196, 1e-05
    %v213 = vadd.f32 %v197, 1e-05
    %v214 = vadd.f32 %v198, 1e-05
    %v215 = vadd.f32 %v199, 1e-05
    %v216 = vadd.f32 %v200, 1e-05
    %v217 = vadd.f32 %v201, 1e-05
    %v218 = vadd.f32 %v202, 1e-05
    %v219 = vrsqrt.pop %v203
    %v220 = vrsqrt.pop %v204
    %v221 = vrsqrt.pop %v205
    %v222 = vrsqrt.pop %v206
    %v223 = vrsqrt.pop %v207
    %v224 = vrsqrt.pop %v208
    %v225 = vrsqrt.pop %v209
    %v226 = vrsqrt.pop %v210
    %v227 = vrsqrt.pop %v211
    %v228 = vrsqrt.pop %v212
    %v229 = vrsqrt.pop %v213
    %v230 = vrsqrt.pop %v214
    %v231 = vrsqrt.pop %v215
    %v232 = vrsqrt.pop %v216
    %v233 = vrsqrt.pop %v217
    %v234 = vrsqrt.pop %v218
    %v235 = vmul.f32 %v107, %v219
    %v236 = vmul.f32 %v108, %v220
    %v237 = vmul.f32 %v109, %v221
    %v238 = vmul.f32 %v110, %v222
    %v239 = vmul.f32 %v111, %v223
    %v240 = vmul.f32 %v112, %v224
    %v241 = vmul.f32 %v113, %v225
    %v242 = vmul.f32 %v114, %v226
    %v243 = vmul.f32 %v115, %v227
    %v244 = vmul.f32 %v116, %v228
    %v245 = vmul.f32 %v117, %v229
    %v246 = vmul.f32 %v118, %v230
    %v247 = vmul.f32 %v119, %v231
    %v248 = vmul.f32 %v120, %v232
    %v249 = vmul.f32 %v121, %v233
    %v250 = vmul.f32 %v122, %v234
    %v252 = vlaneseq
    %v253 = vshrl.u32 %v252, 7
    %v254 = vsub.s32 0, %v253
    %v255 = vrot.slane %v39, %v254
    %v257 = vmul.f32 %v235, %v255
    %v258 = vmul.f32 %v236, %v255
    %v259 = vmul.f32 %v237, %v255
    %v260 = vmul.f32 %v238, %v255
    %v261 = vmul.f32 %v239, %v255
    %v262 = vmul.f32 %v240, %v255
    %v263 = vmul.f32 %v241, %v255
    %v264 = vmul.f32 %v242, %v255
    %v265 = vmul.f32 %v243, %v255
    %v266 = vmul.f32 %v244, %v255
    %v267 = vmul.f32 %v245, %v255
    %v268 = vmul.f32 %v246, %v255
    %v269 = vmul.f32 %v247, %v255
    %v270 = vmul.f32 %v248, %v255
    %v271 = vmul.f32 %v249, %v255
    %v272 = vmul.f32 %v250, %v255
    %v274 = vlaneseq
    %v275 = vshrl.u32 %v274, 7
    %v276 = vsub.s32 0, %v275
    %v277 = vrot.slane %v40, %v276
    %v279 = vadd.f32 %v257, %v277
    %v280 = vadd.f32 %v258, %v277
    %v281 = vadd.f32 %v259, %v277
    %v282 = vadd.f32 %v260, %v277
    %v283 = vadd.f32 %v261, %v277
    %v284 = vadd.f32 %v262, %v277
    %v285 = vadd.f32 %v263, %v277
    %v286 = vadd.f32 %v264, %v277
    %v287 = vadd.f32 %v265, %v277
    %v288 = vadd.f32 %v266, %v277
    %v289 = vadd.f32 %v267, %v277
    %v290 = vadd.f32 %v268, %v277
    %v291 = vadd.f32 %v269, %v277
    %v292 = vadd.f32 %v270, %v277
    %v293 = vadd.f32 %v271, %v277
    %v294 = vadd.f32 %v272, %v277
    %295 = vst.msk [vmem:[%s5] sm:$0xff] %vm41, %v279
    %296 = vst.msk [vmem:[%s5 + $0x8] sm:$0xff] %vm41, %v280
    %297 = vst.msk [vmem:[%s5 + $0x10] sm:$0xff] %vm41, %v281
    %298 = vst.msk [vmem:[%s5 + $0x18] sm:$0xff] %vm41, %v282
    %299 = vst.msk [vmem:[%s5 + $0x20] sm:$0xff] %vm41, %v283
    %300 = vst.msk [vmem:[%s5 + $0x28] sm:$0xff] %vm41, %v284
    %301 = vst.msk [vmem:[%s5 + $0x30] sm:$0xff] %vm41, %v285
    %302 = vst.msk [vmem:[%s5 + $0x38] sm:$0xff] %vm41, %v286
    %303 = vst.msk [vmem:[%s5 + $0x40] sm:$0xff] %vm41, %v287
    %304 = vst.msk [vmem:[%s5 + $0x48] sm:$0xff] %vm41, %v288
    %305 = vst.msk [vmem:[%s5 + $0x50] sm:$0xff] %vm41, %v289
    %306 = vst.msk [vmem:[%s5 + $0x58] sm:$0xff] %vm41, %v290
    %307 = vst.msk [vmem:[%s5 + $0x60] sm:$0xff] %vm41, %v291
    %308 = vst.msk [vmem:[%s5 + $0x68] sm:$0xff] %vm41, %v292
    %309 = vst.msk [vmem:[%s5 + $0x70] sm:$0xff] %vm41, %v293
    %310 = vst.msk [vmem:[%s5 + $0x78] sm:$0xff] %vm41, %v294
    %v311 = vld [vmem:[%s3] sm:$0xff]
    %v312 = vld [vmem:[%s4] sm:$0xff]
    %314 = vset.pattern.permute.xlu0 0
    %315 = vperm.xlu0 %314, %v312
    %v316 = vpop.permute.xlu0 %315
    %v319 = vsel %vm41, %v311, 0
    %v322 = vsel %vm41, %v279, 0
    %v325 = vsel %vm41, %v280, 0
    %v328 = vsel %vm41, %v281, 0
    %v331 = vsel %vm41, %v282, 0
    %v334 = vsel %vm41, %v283, 0
    %v337 = vsel %vm41, %v284, 0
    %v340 = vsel %vm41, %v285, 0
    %v343 = vsel %vm41, %v286, 0
    %v346 = vsel %vm41, %v287, 0
    %v349 = vsel %vm41, %v288, 0
    %v352 = vsel %vm41, %v289, 0
    %v355 = vsel %vm41, %v290, 0
    %v358 = vsel %vm41, %v291, 0
    %v361 = vsel %vm41, %v292, 0
    %v364 = vsel %vm41, %v293, 0
    %v367 = vsel %vm41, %v294, 0
    %369 = vmatprep.subr.mxu0 0.0
    %370 = vmatpush1.xpose.msra.mxu0 %v322
    %371 = vmatprep.subr.mxu0 0.0
    %372 = vmatpush1.xpose.msra.mxu0 %v325
    %373 = vmatprep.subr.mxu0 0.0
    %374 = vmatpush1.xpose.msra.mxu0 %v328
    %375 = vmatprep.subr.mxu0 0.0
    %376 = vmatpush1.xpose.msra.mxu0 %v331
    %377 = vmatprep.subr.mxu0 0.0
    %378 = vmatpush1.xpose.msra.mxu0 %v334
    %379 = vmatprep.subr.mxu0 0.0
    %380 = vmatpush1.xpose.msra.mxu0 %v337
    %381 = vmatprep.subr.mxu0 0.0
    %382 = vmatpush1.xpose.msra.mxu0 %v340
    %383 = vmatprep.subr.mxu0 0.0
    %384 = vmatpush1.xpose.msra.mxu0 %v343
    %385 = vmatprep.subr.mxu0 0.0
    %386 = vmatpush1.xpose.msra.mxu0 %v346
    %387 = vmatprep.subr.mxu0 0.0
    %388 = vmatpush1.xpose.msra.mxu0 %v349
    %389 = vmatprep.subr.mxu0 0.0
    %390 = vmatpush1.xpose.msra.mxu0 %v352
    %391 = vmatprep.subr.mxu0 0.0
    %392 = vmatpush1.xpose.msra.mxu0 %v355
    %393 = vmatprep.subr.mxu0 0.0
    %394 = vmatpush1.xpose.msra.mxu0 %v358
    %395 = vmatprep.subr.mxu0 0.0
    %396 = vmatpush1.xpose.msra.mxu0 %v361
    %397 = vmatprep.subr.mxu0 0.0
    %398 = vmatpush1.xpose.msra.mxu0 %v364
    %399 = vmatprep.subr.mxu0 0.0
    %400 = vmatpush1.xpose.msra.mxu0 %v367
    %401 = vmatprep.subr.mxu0 0.0
    %402 = vmatpush1.xpose.msra.mxu0 0.0
    %403 = vmatprep.subr.mxu0 0.0
    %404 = vmatpush1.xpose.msra.mxu0 0.0
    %405 = vmatprep.subr.mxu0 0.0
    %406 = vmatpush1.xpose.msra.mxu0 0.0
    %407 = vmatprep.subr.mxu0 0.0
    %408 = vmatpush1.xpose.msra.mxu0 0.0
    %409 = vmatprep.subr.mxu0 0.0
    %410 = vmatpush1.xpose.msra.mxu0 0.0
    %411 = vmatprep.subr.mxu0 0.0
    %412 = vmatpush1.xpose.msra.mxu0 0.0
    %413 = vmatprep.subr.mxu0 0.0
    %414 = vmatpush1.xpose.msra.mxu0 0.0
    %415 = vmatprep.subr.mxu0 0.0
    %416 = vmatpush1.xpose.msra.mxu0 0.0
    %417 = vmatprep.subr.mxu0 0.0
    %418 = vmatpush1.xpose.msra.mxu0 0.0
    %419 = vmatprep.subr.mxu0 0.0
    %420 = vmatpush1.xpose.msra.mxu0 0.0
    %421 = vmatprep.subr.mxu0 0.0
    %422 = vmatpush1.xpose.msra.mxu0 0.0
    %423 = vmatprep.subr.mxu0 0.0
    %424 = vmatpush1.xpose.msra.mxu0 0.0
    %425 = vmatprep.subr.mxu0 0.0
    %426 = vmatpush1.xpose.msra.mxu0 0.0
    %427 = vmatprep.subr.mxu0 0.0
    %428 = vmatpush1.xpose.msra.mxu0 0.0
    %429 = vmatprep.subr.mxu0 0.0
    %430 = vmatpush1.xpose.msra.mxu0 0.0
    %431 = vmatprep.subr.mxu0 0.0
    %432 = vmatpush1.xpose.msra.mxu0 0.0
    %433 = vmatprep.mubr.f32.mxu0 0.0
    %434 = vmatmul.mubr.f32.gmra.mrb[0].mxu0 %v319
    %v435 = vpop.f32.mrb[0].mxu0
    %v436 = vadd.f32 %v316, %v435
    %v437 = vpop.f32.mrb[0].mxu0
    %438 = vdwg.mxu0
    %439 = vst [vmem:[#allocation2] sm:$0xff] %v436
    // Predicated region
    $region22: #{tpu_custom_call.1} parent=1 // pred_check
      _
    $region23: #{tpu_custom_call.1} parent=1 // pred_check_branch
      %441 = sbr.rel (0) target = $region25
    $region24: #{tpu_custom_call.1} parent=1 // pred_region
      _
    $region25: #{tpu_custom_call.1} parent=1 // pred_fallthru
      _
    // Predicated region
    $region26: #{tpu_custom_call.1} parent=1 // pred_check
      _
    $region27: #{tpu_custom_call.1} parent=1 // pred_check_branch
      %443 = sbr.rel (0) target = $region29
    $region28: #{tpu_custom_call.1} parent=1 // pred_region
      %s445 = ssub.s32 128, 128
      %446 = vsyncadd [#allocation3], %s445
      %s448 = sshll.u32 [#allocation2], 4
      %s449 = int_to_ptr.vmem [resolvable:$true] %s448
      %451 = dma.vmem_to_hbm [thread:$0]  %s449, 128, %s6, [#allocation3]
    $region29: #{tpu_custom_call.1} parent=1 // pred_fallthru
      _
    // Predicated region
    $region30: #{tpu_custom_call.1} parent=1 // pred_check
      _
    $region31: #{tpu_custom_call.1} parent=1 // pred_check_branch
      %453 = sbr.rel (0) target = $region33
    $region32: #{tpu_custom_call.1} parent=1 // pred_region
      _
    $region33: #{tpu_custom_call.1} parent=1 // pred_fallthru
      _
    // Predicated region
    $region34: #{tpu_custom_call.1} parent=1 // pred_check
      _
    $region35: #{tpu_custom_call.1} parent=1 // pred_check_branch
      %455 = sbr.rel (0) target = $region37
    $region36: #{tpu_custom_call.1} parent=1 // pred_region
      %456 = dma.done [#allocation3], 128
    $region37: #{tpu_custom_call.1} parent=1 // pred_fallthru
      _
    %457 = vsyncpa [#allocation3], 1

// kernel: tpu_custom_call.1
$region0: #{tpu_custom_call.1}
  #allocation0 [shape = 'u32[]', space=smem, size = 0x4, offset = 0x4, fixed_abs, tag = 'smem constant byte address 0x4 - core index']
  #allocation1 [shape = 'u32[144,128]{1,0:T(1,128)}', space=vmem, size = 0x12000, scoped, tag = 'internal scratch']
  %s0 = inlined_call_operand.vmem [shape: f32[128,32], index: 0, kind: input, shape index: {}]
  %s1 = inlined_call_operand.vmem [shape: f32[1,32], index: 1, kind: input, shape index: {}]
  %s2 = inlined_call_operand.vmem [shape: f32[1,32], index: 2, kind: input, shape index: {}]
  %s3 = inlined_call_operand.vmem [shape: f32[8,32], index: 3, kind: input, shape index: {}]
  %s4 = inlined_call_operand.vmem [shape: f32[8,1], index: 4, kind: input, shape index: {}]
  %s5 = inlined_call_operand.vmem [shape: f32[128,32], index: 5, kind: output, shape index: {0}]
  %s6 = inlined_call_operand.hbm [shape: f32[8,128], index: 6, kind: output, shape index: {1}]
  %7 = xla_tuple %s5, %s6
  %s8 = sld [smem:[#allocation0]]
  $region38: #{tpu_custom_call.1} parent=0
    _
  %s10 = ssub.s32 1, %s8
  %s11 = scalar_select 0, %s10, %s8
  $region1: #{tpu_custom_call.1} parent=0
    #allocation2 [shape = 'u8[4096]{0}', space=vmem, size = 0x1000, scoped, tag = 'output window, operand 1, single buffered']
    #allocation3 [shape = 's32[1]{0}', space=sflag, size = 0x4, scoped, tag = 'scoped memory for tpu_custom_call.1']
    %12 = vsyncpa [#allocation3], 0
    // Predicated region
    $region2: #{tpu_custom_call.1} parent=1 // pred_check
      _
    $region3: #{tpu_custom_call.1} parent=1 // pred_check_branch
      %14 = sbr.rel (0) target = $region5
    $region4: #{tpu_custom_call.1} parent=1 // pred_region
      _
    $region5: #{tpu_custom_call.1} parent=1 // pred_fallthru
      _
    // Predicated region
    $region6: #{tpu_custom_call.1} parent=1 // pred_check
      _
    $region7: #{tpu_custom_call.1} parent=1 // pred_check_branch
      %16 = sbr.rel (0) target = $region9
    $region8: #{tpu_custom_call.1} parent=1 // pred_region
      _
    $region9: #{tpu_custom_call.1} parent=1 // pred_fallthru
      _
    // Predicated region
    $region10: #{tpu_custom_call.1} parent=1 // pred_check
      _
    $region11: #{tpu_custom_call.1} parent=1 // pred_check_branch
      %18 = sbr.rel (0) target = $region13
    $region12: #{tpu_custom_call.1} parent=1 // pred_region
      _
    $region13: #{tpu_custom_call.1} parent=1 // pred_fallthru
      _
    // Predicated region
    $region14: #{tpu_custom_call.1} parent=1 // pred_check
      _
    $region15: #{tpu_custom_call.1} parent=1 // pred_check_branch
      %20 = sbr.rel (0) target = $region17
    $region16: #{tpu_custom_call.1} parent=1 // pred_region
      _
    $region17: #{tpu_custom_call.1} parent=1 // pred_fallthru
      _
    // Predicated region
    $region18: #{tpu_custom_call.1} parent=1 // pred_check
      _
    $region19: #{tpu_custom_call.1} parent=1 // pred_check_branch
      %22 = sbr.rel (0) target = $region21
    $region20: #{tpu_custom_call.1} parent=1 // pred_region
      _
    $region21: #{tpu_custom_call.1} parent=1 // pred_fallthru
      _
    %v23 = vld [vmem:[%s0] sm:$0xff]
    %v24 = vld [vmem:[%s0 + $0x8] sm:$0xff]
    %v25 = vld [vmem:[%s0 + $0x10] sm:$0xff]
    %v26 = vld [vmem:[%s0 + $0x18] sm:$0xff]
    %v27 = vld [vmem:[%s0 + $0x20] sm:$0xff]
    %v28 = vld [vmem:[%s0 + $0x28] sm:$0xff]
    %v29 = vld [vmem:[%s0 + $0x30] sm:$0xff]
    %v30 = vld [vmem:[%s0 + $0x38] sm:$0xff]
    %v31 = vld [vmem:[%s0 + $0x40] sm:$0xff]
    %v32 = vld [vmem:[%s0 + $0x48] sm:$0xff]
    %v33 = vld [vmem:[%s0 + $0x50] sm:$0xff]
    %v34 = vld [vmem:[%s0 + $0x58] sm:$0xff]
    %v35 = vld [vmem:[%s0 + $0x60] sm:$0xff]
    %v36 = vld [vmem:[%s0 + $0x68] sm:$0xff]
    %v37 = vld [vmem:[%s0 + $0x70] sm:$0xff]
    %v38 = vld [vmem:[%s0 + $0x78] sm:$0xff]
    %v39 = vld [vmem:[%s1] sm:$0x1]
    %v40 = vld [vmem:[%s2] sm:$0x1]
    %vm41 = vcmask 261120
    %v42 = vsel %vm41, %v23, 0.0
    %43 = vadd.xlane.f32.xlu0 %v42
    %v44 = vpop.xlane.xlu0 %43
    %v45 = vsel %vm41, %v24, 0.0
    %46 = vadd.xlane.f32.xlu0 %v45
    %v47 = vpop.xlane.xlu0 %46
    %v48 = vsel %vm41, %v25, 0.0
    %49 = vadd.xlane.f32.xlu0 %v48
    %v50 = vpop.xlane.xlu0 %49
    %v51 = vsel %vm41, %v26, 0.0
    %52 = vadd.xlane.f32.xlu0 %v51
    %v53 = vpop.xlane.xlu0 %52
    %v54 = vsel %vm41, %v27, 0.0
    %55 = vadd.xlane.f32.xlu0 %v54
    %v56 = vpop.xlane.xlu0 %55
    %v57 = vsel %vm41, %v28, 0.0
    %58 = vadd.xlane.f32.xlu0 %v57
    %v59 = vpop.xlane.xlu0 %58
    %v60 = vsel %vm41, %v29, 0.0
    %61 = vadd.xlane.f32.xlu0 %v60
    %v62 = vpop.xlane.xlu0 %61
    %v63 = vsel %vm41, %v30, 0.0
    %64 = vadd.xlane.f32.xlu0 %v63
    %v65 = vpop.xlane.xlu0 %64
    %v66 = vsel %vm41, %v31, 0.0
    %67 = vadd.xlane.f32.xlu0 %v66
    %v68 = vpop.xlane.xlu0 %67
    %v69 = vsel %vm41, %v32, 0.0
    %70 = vadd.xlane.f32.xlu0 %v69
    %v71 = vpop.xlane.xlu0 %70
    %v72 = vsel %vm41, %v33, 0.0
    %73 = vadd.xlane.f32.xlu0 %v72
    %v74 = vpop.xlane.xlu0 %73
    %v75 = vsel %vm41, %v34, 0.0
    %76 = vadd.xlane.f32.xlu0 %v75
    %v77 = vpop.xlane.xlu0 %76
    %v78 = vsel %vm41, %v35, 0.0
    %79 = vadd.xlane.f32.xlu0 %v78
    %v80 = vpop.xlane.xlu0 %79
    %v81 = vsel %vm41, %v36, 0.0
    %82 = vadd.xlane.f32.xlu0 %v81
    %v83 = vpop.xlane.xlu0 %82
    %v84 = vsel %vm41, %v37, 0.0
    %85 = vadd.xlane.f32.xlu0 %v84
    %v86 = vpop.xlane.xlu0 %85
    %v87 = vsel %vm41, %v38, 0.0
    %88 = vadd.xlane.f32.xlu0 %v87
    %v89 = vpop.xlane.xlu0 %88
    %v90 = vrcp.pop 32.0
    %v91 = vmul.f32 %v44, %v90
    %v92 = vmul.f32 %v47, %v90
    %v93 = vmul.f32 %v50, %v90
    %v94 = vmul.f32 %v53, %v90
    %v95 = vmul.f32 %v56, %v90
    %v96 = vmul.f32 %v59, %v90
    %v97 = vmul.f32 %v62, %v90
    %v98 = vmul.f32 %v65, %v90
    %v99 = vmul.f32 %v68, %v90
    %v100 = vmul.f32 %v71, %v90
    %v101 = vmul.f32 %v74, %v90
    %v102 = vmul.f32 %v77, %v90
    %v103 = vmul.f32 %v80, %v90
    %v104 = vmul.f32 %v83, %v90
    %v105 = vmul.f32 %v86, %v90
    %v106 = vmul.f32 %v89, %v90
    %v107 = vsub.f32 %v23, %v91
    %v108 = vsub.f32 %v24, %v92
    %v109 = vsub.f32 %v25, %v93
    %v110 = vsub.f32 %v26, %v94
    %v111 = vsub.f32 %v27, %v95
    %v112 = vsub.f32 %v28, %v96
    %v113 = vsub.f32 %v29, %v97
    %v114 = vsub.f32 %v30, %v98
    %v115 = vsub.f32 %v31, %v99
    %v116 = vsub.f32 %v32, %v100
    %v117 = vsub.f32 %v33, %v101
    %v118 = vsub.f32 %v34, %v102
    %v119 = vsub.f32 %v35, %v103
    %v120 = vsub.f32 %v36, %v104
    %v121 = vsub.f32 %v37, %v105
    %v122 = vsub.f32 %v38, %v106
    %v123 = vmul.f32 %v107, %v107
    %v124 = vmul.f32 %v108, %v108
    %v125 = vmul.f32 %v109, %v109
    %v126 = vmul.f32 %v110, %v110
    %v127 = vmul.f32 %v111, %v111
    %v128 = vmul.f32 %v112, %v112
    %v129 = vmul.f32 %v113, %v113
    %v130 = vmul.f32 %v114, %v114
    %v131 = vmul.f32 %v115, %v115
    %v132 = vmul.f32 %v116, %v116
    %v133 = vmul.f32 %v117, %v117
    %v134 = vmul.f32 %v118, %v118
    %v135 = vmul.f32 %v119, %v119
    %v136 = vmul.f32 %v120, %v120
    %v137 = vmul.f32 %v121, %v121
    %v138 = vmul.f32 %v122, %v122
    %v139 = vsel %vm41, %v123, 0.0
    %140 = vadd.xlane.f32.xlu0 %v139
    %v141 = vpop.xlane.xlu0 %140
    %v142 = vsel %vm41, %v124, 0.0
    %143 = vadd.xlane.f32.xlu0 %v142
    %v144 = vpop.xlane.xlu0 %143
    %v145 = vsel %vm41, %v125, 0.0
    %146 = vadd.xlane.f32.xlu0 %v145
    %v147 = vpop.xlane.xlu0 %146
    %v148 = vsel %vm41, %v126, 0.0
    %149 = vadd.xlane.f32.xlu0 %v148
    %v150 = vpop.xlane.xlu0 %149
    %v151 = vsel %vm41, %v127, 0.0
    %152 = vadd.xlane.f32.xlu0 %v151
    %v153 = vpop.xlane.xlu0 %152
    %v154 = vsel %vm41, %v128, 0.0
    %155 = vadd.xlane.f32.xlu0 %v154
    %v156 = vpop.xlane.xlu0 %155
    %v157 = vsel %vm41, %v129, 0.0
    %158 = vadd.xlane.f32.xlu0 %v157
    %v159 = vpop.xlane.xlu0 %158
    %v160 = vsel %vm41, %v130, 0.0
    %161 = vadd.xlane.f32.xlu0 %v160
    %v162 = vpop.xlane.xlu0 %161
    %v163 = vsel %vm41, %v131, 0.0
    %164 = vadd.xlane.f32.xlu0 %v163
    %v165 = vpop.xlane.xlu0 %164
    %v166 = vsel %vm41, %v132, 0.0
    %167 = vadd.xlane.f32.xlu0 %v166
    %v168 = vpop.xlane.xlu0 %167
    %v169 = vsel %vm41, %v133, 0.0
    %170 = vadd.xlane.f32.xlu0 %v169
    %v171 = vpop.xlane.xlu0 %170
    %v172 = vsel %vm41, %v134, 0.0
    %173 = vadd.xlane.f32.xlu0 %v172
    %v174 = vpop.xlane.xlu0 %173
    %v175 = vsel %vm41, %v135, 0.0
    %176 = vadd.xlane.f32.xlu0 %v175
    %v177 = vpop.xlane.xlu0 %176
    %v178 = vsel %vm41, %v136, 0.0
    %179 = vadd.xlane.f32.xlu0 %v178
    %v180 = vpop.xlane.xlu0 %179
    %v181 = vsel %vm41, %v137, 0.0
    %182 = vadd.xlane.f32.xlu0 %v181
    %v183 = vpop.xlane.xlu0 %182
    %v184 = vsel %vm41, %v138, 0.0
    %185 = vadd.xlane.f32.xlu0 %v184
    %v186 = vpop.xlane.xlu0 %185
    %v187 = vmul.f32 %v141, %v90
    %v188 = vmul.f32 %v144, %v90
    %v189 = vmul.f32 %v147, %v90
    %v190 = vmul.f32 %v150, %v90
    %v191 = vmul.f32 %v153, %v90
    %v192 = vmul.f32 %v156, %v90
    %v193 = vmul.f32 %v159, %v90
    %v194 = vmul.f32 %v162, %v90
    %v195 = vmul.f32 %v165, %v90
    %v196 = vmul.f32 %v168, %v90
    %v197 = vmul.f32 %v171, %v90
    %v198 = vmul.f32 %v174, %v90
    %v199 = vmul.f32 %v177, %v90
    %v200 = vmul.f32 %v180, %v90
    %v201 = vmul.f32 %v183, %v90
    %v202 = vmul.f32 %v186, %v90
    %v203 = vadd.f32 %v187, 1e-05
    %v204 = vadd.f32 %v188, 1e-05
    %v205 = vadd.f32 %v189, 1e-05
    %v206 = vadd.f32 %v190, 1e-05
    %v207 = vadd.f32 %v191, 1e-05
    %v208 = vadd.f32 %v192, 1e-05
    %v209 = vadd.f32 %v193, 1e-05
    %v210 = vadd.f32 %v194, 1e-05
    %v211 = vadd.f32 %v195, 1e-05
    %v212 = vadd.f32 %v196, 1e-05
    %v213 = vadd.f32 %v197, 1e-05
    %v214 = vadd.f32 %v198, 1e-05
    %v215 = vadd.f32 %v199, 1e-05
    %v216 = vadd.f32 %v200, 1e-05
    %v217 = vadd.f32 %v201, 1e-05
    %v218 = vadd.f32 %v202, 1e-05
    %v219 = vrsqrt.pop %v203
    %v220 = vrsqrt.pop %v204
    %v221 = vrsqrt.pop %v205
    %v222 = vrsqrt.pop %v206
    %v223 = vrsqrt.pop %v207
    %v224 = vrsqrt.pop %v208
    %v225 = vrsqrt.pop %v209
    %v226 = vrsqrt.pop %v210
    %v227 = vrsqrt.pop %v211
    %v228 = vrsqrt.pop %v212
    %v229 = vrsqrt.pop %v213
    %v230 = vrsqrt.pop %v214
    %v231 = vrsqrt.pop %v215
    %v232 = vrsqrt.pop %v216
    %v233 = vrsqrt.pop %v217
    %v234 = vrsqrt.pop %v218
    %v235 = vmul.f32 %v107, %v219
    %v236 = vmul.f32 %v108, %v220
    %v237 = vmul.f32 %v109, %v221
    %v238 = vmul.f32 %v110, %v222
    %v239 = vmul.f32 %v111, %v223
    %v240 = vmul.f32 %v112, %v224
    %v241 = vmul.f32 %v113, %v225
    %v242 = vmul.f32 %v114, %v226
    %v243 = vmul.f32 %v115, %v227
    %v244 = vmul.f32 %v116, %v228
    %v245 = vmul.f32 %v117, %v229
    %v246 = vmul.f32 %v118, %v230
    %v247 = vmul.f32 %v119, %v231
    %v248 = vmul.f32 %v120, %v232
    %v249 = vmul.f32 %v121, %v233
    %v250 = vmul.f32 %v122, %v234
    %v252 = vlaneseq
    %v253 = vshrl.u32 %v252, 7
    %v254 = vsub.s32 0, %v253
    %v255 = vrot.slane %v39, %v254
    %v257 = vmul.f32 %v235, %v255
    %v258 = vmul.f32 %v236, %v255
    %v259 = vmul.f32 %v237, %v255
    %v260 = vmul.f32 %v238, %v255
    %v261 = vmul.f32 %v239, %v255
    %v262 = vmul.f32 %v240, %v255
    %v263 = vmul.f32 %v241, %v255
    %v264 = vmul.f32 %v242, %v255
    %v265 = vmul.f32 %v243, %v255
    %v266 = vmul.f32 %v244, %v255
    %v267 = vmul.f32 %v245, %v255
    %v268 = vmul.f32 %v246, %v255
    %v269 = vmul.f32 %v247, %v255
    %v270 = vmul.f32 %v248, %v255
    %v271 = vmul.f32 %v249, %v255
    %v272 = vmul.f32 %v250, %v255
    %v274 = vlaneseq
    %v275 = vshrl.u32 %v274, 7
    %v276 = vsub.s32 0, %v275
    %v277 = vrot.slane %v40, %v276
    %v279 = vadd.f32 %v257, %v277
    %v280 = vadd.f32 %v258, %v277
    %v281 = vadd.f32 %v259, %v277
    %v282 = vadd.f32 %v260, %v277
    %v283 = vadd.f32 %v261, %v277
    %v284 = vadd.f32 %v262, %v277
    %v285 = vadd.f32 %v263, %v277
    %v286 = vadd.f32 %v264, %v277
    %v287 = vadd.f32 %v265, %v277
    %v288 = vadd.f32 %v266, %v277
    %v289 = vadd.f32 %v267, %v277
    %v290 = vadd.f32 %v268, %v277
    %v291 = vadd.f32 %v269, %v277
    %v292 = vadd.f32 %v270, %v277
    %v293 = vadd.f32 %v271, %v277
    %v294 = vadd.f32 %v272, %v277
    %295 = vst.msk [vmem:[%s5] sm:$0xff] %vm41, %v279
    %296 = vst.msk [vmem:[%s5 + $0x8] sm:$0xff] %vm41, %v280
    %297 = vst.msk [vmem:[%s5 + $0x10] sm:$0xff] %vm41, %v281
    %298 = vst.msk [vmem:[%s5 + $0x18] sm:$0xff] %vm41, %v282
    %299 = vst.msk [vmem:[%s5 + $0x20] sm:$0xff] %vm41, %v283
    %300 = vst.msk [vmem:[%s5 + $0x28] sm:$0xff] %vm41, %v284
    %301 = vst.msk [vmem:[%s5 + $0x30] sm:$0xff] %vm41, %v285
    %302 = vst.msk [vmem:[%s5 + $0x38] sm:$0xff] %vm41, %v286
    %303 = vst.msk [vmem:[%s5 + $0x40] sm:$0xff] %vm41, %v287
    %304 = vst.msk [vmem:[%s5 + $0x48] sm:$0xff] %vm41, %v288
    %305 = vst.msk [vmem:[%s5 + $0x50] sm:$0xff] %vm41, %v289
    %306 = vst.msk [vmem:[%s5 + $0x58] sm:$0xff] %vm41, %v290
    %307 = vst.msk [vmem:[%s5 + $0x60] sm:$0xff] %vm41, %v291
    %308 = vst.msk [vmem:[%s5 + $0x68] sm:$0xff] %vm41, %v292
    %309 = vst.msk [vmem:[%s5 + $0x70] sm:$0xff] %vm41, %v293
    %310 = vst.msk [vmem:[%s5 + $0x78] sm:$0xff] %vm41, %v294
    %v311 = vld [vmem:[%s3] sm:$0xff]
    %v312 = vld [vmem:[%s4] sm:$0xff]
    %314 = vset.pattern.permute.xlu0 0
    %315 = vperm.xlu0 %314, %v312
    %v316 = vpop.permute.xlu0 %315
    %v319 = vsel %vm41, %v311, 0
    %v322 = vsel %vm41, %v279, 0
    %v325 = vsel %vm41, %v280, 0
    %v328 = vsel %vm41, %v281, 0
    %v331 = vsel %vm41, %v282, 0
    %v334 = vsel %vm41, %v283, 0
    %v337 = vsel %vm41, %v284, 0
    %v340 = vsel %vm41, %v285, 0
    %v343 = vsel %vm41, %v286, 0
    %v346 = vsel %vm41, %v287, 0
    %v349 = vsel %vm41, %v288, 0
    %v352 = vsel %vm41, %v289, 0
    %v355 = vsel %vm41, %v290, 0
    %v358 = vsel %vm41, %v291, 0
    %v361 = vsel %vm41, %v292, 0
    %v364 = vsel %vm41, %v293, 0
    %v367 = vsel %vm41, %v294, 0
    %369 = vmatprep.subr.mxu0 0.0
    %370 = vmatpush1.xpose.msra.mxu0 %v322
    %371 = vmatprep.subr.mxu0 0.0
    %372 = vmatpush1.xpose.msra.mxu0 %v325
    %373 = vmatprep.subr.mxu0 0.0
    %374 = vmatpush1.xpose.msra.mxu0 %v328
    %375 = vmatprep.subr.mxu0 0.0
    %376 = vmatpush1.xpose.msra.mxu0 %v331
    %377 = vmatprep.subr.mxu0 0.0
    %378 = vmatpush1.xpose.msra.mxu0 %v334
    %379 = vmatprep.subr.mxu0 0.0
    %380 = vmatpush1.xpose.msra.mxu0 %v337
    %381 = vmatprep.subr.mxu0 0.0
    %382 = vmatpush1.xpose.msra.mxu0 %v340
    %383 = vmatprep.subr.mxu0 0.0
    %384 = vmatpush1.xpose.msra.mxu0 %v343
    %385 = vmatprep.subr.mxu0 0.0
    %386 = vmatpush1.xpose.msra.mxu0 %v346
    %387 = vmatprep.subr.mxu0 0.0
    %388 = vmatpush1.xpose.msra.mxu0 %v349
    %389 = vmatprep.subr.mxu0 0.0
    %390 = vmatpush1.xpose.msra.mxu0 %v352
    %391 = vmatprep.subr.mxu0 0.0
    %392 = vmatpush1.xpose.msra.mxu0 %v355
    %393 = vmatprep.subr.mxu0 0.0
    %394 = vmatpush1.xpose.msra.mxu0 %v358
    %395 = vmatprep.subr.mxu0 0.0
    %396 = vmatpush1.xpose.msra.mxu0 %v361
    %397 = vmatprep.subr.mxu0 0.0
    %398 = vmatpush1.xpose.msra.mxu0 %v364
    %399 = vmatprep.subr.mxu0 0.0
    %400 = vmatpush1.xpose.msra.mxu0 %v367
    %401 = vmatprep.subr.mxu0 0.0
    %402 = vmatpush1.xpose.msra.mxu0 0.0
    %403 = vmatprep.subr.mxu0 0.0
    %404 = vmatpush1.xpose.msra.mxu0 0.0
    %405 = vmatprep.subr.mxu0 0.0
    %406 = vmatpush1.xpose.msra.mxu0 0.0
    %407 = vmatprep.subr.mxu0 0.0
    %408 = vmatpush1.xpose.msra.mxu0 0.0
    %409 = vmatprep.subr.mxu0 0.0
    %410 = vmatpush1.xpose.msra.mxu0 0.0
    %411 = vmatprep.subr.mxu0 0.0
    %412 = vmatpush1.xpose.msra.mxu0 0.0
    %413 = vmatprep.subr.mxu0 0.0
    %414 = vmatpush1.xpose.msra.mxu0 0.0
    %415 = vmatprep.subr.mxu0 0.0
    %416 = vmatpush1.xpose.msra.mxu0 0.0
    %417 = vmatprep.subr.mxu0 0.0
    %418 = vmatpush1.xpose.msra.mxu0 0.0
    %419 = vmatprep.subr.mxu0 0.0
    %420 = vmatpush1.xpose.msra.mxu0 0.0
    %421 = vmatprep.subr.mxu0 0.0
    %422 = vmatpush1.xpose.msra.mxu0 0.0
    %423 = vmatprep.subr.mxu0 0.0
    %424 = vmatpush1.xpose.msra.mxu0 0.0
    %425 = vmatprep.subr.mxu0 0.0
    %426 = vmatpush1.xpose.msra.mxu0 0.0
    %427 = vmatprep.subr.mxu0 0.0
    %428 = vmatpush1.xpose.msra.mxu0 0.0
    %429 = vmatprep.subr.mxu0 0.0
    %430 = vmatpush1.xpose.msra.mxu0 0.0
    %431 = vmatprep.subr.mxu0 0.0
    %432 = vmatpush1.xpose.msra.mxu0 0.0
    %433 = vmatprep.mubr.f32.mxu0 0.0
    %434 = vmatmul.mubr.f32.gmra.mrb[0].mxu0 %v319
    %v435 = vpop.f32.mrb[0].mxu0
    %v436 = vadd.f32 %v316, %v435
    %v437 = vpop.f32.mrb[0].mxu0
    %438 = vdwg.mxu0
    %439 = vst [vmem:[#allocation2] sm:$0xff] %v436
    // Predicated region
    $region22: #{tpu_custom_call.1} parent=1 // pred_check
      _
    $region23: #{tpu_custom_call.1} parent=1 // pred_check_branch
      %441 = sbr.rel (0) target = $region25
    $region24: #{tpu_custom_call.1} parent=1 // pred_region
      _
    $region25: #{tpu_custom_call.1} parent=1 // pred_fallthru
      _
    // Predicated region
    $region26: #{tpu_custom_call.1} parent=1 // pred_check
      _
    $region27: #{tpu_custom_call.1} parent=1 // pred_check_branch
      %443 = sbr.rel (0) target = $region29
    $region28: #{tpu_custom_call.1} parent=1 // pred_region
      %s445 = ssub.s32 128, 128
      %446 = vsyncadd [#allocation3], %s445
      %s448 = sshll.u32 [#allocation2], 4
      %s449 = int_to_ptr.vmem [resolvable:$true] %s448
      %451 = dma.vmem_to_hbm [thread:$0]  %s449, 128, %s6, [#allocation3]
    $region29: #{tpu_custom_call.1} parent=1 // pred_fallthru
      _
    // Predicated region
    $region30: #{tpu_custom_call.1} parent=1 // pred_check
      _
    $region31: #{tpu_custom_call.1} parent=1 // pred_check_branch
      %453 = sbr.rel (0) target = $region33
    $region32: #{tpu_custom_call.1} parent=1 // pred_region
      _
    $region33: #{tpu_custom_call.1} parent=1 // pred_fallthru
      _
    // Predicated region
    $region34: #{tpu_custom_call.1} parent=1 // pred_check
      _
    $region35: #{tpu_custom_call.1} parent=1 // pred_check_branch
      %455 = sbr.rel (0) target = $region37
    $region36: #{tpu_custom_call.1} parent=1 // pred_region
      %456 = dma.done [#allocation3], 128
    $region37: #{tpu_custom_call.1} parent=1 // pred_fallthru
      _
    %457 = vsyncpa [#allocation3], 1

</llo_original>
